<compile_context>
chip_gen: v5e
topology: v5e:2x2
jax: 0.10.0
libtpu: 0.0.40
codegen_flags: <defaults>
</compile_context>

<pallas_src>
import functools

import jax
import jax.numpy as jnp
from jax import lax
from jax.experimental import pallas as pl
from jax.experimental.pallas import tpu as pltpu


def _lstm_kernel(x_ref, wih_ref, whh_ref, b_ref, wlin_ref, blin_ref, out_ref,
                 *, T, B, H):
    """Single-invocation LSTM forward + linear head.

    x_ref:    (T*B, E)  time-major embedded sequence
    wih_ref:  (E, 4H)   W_ih^T   (PyTorch gate order [i | f | g | o] along lanes)
    whh_ref:  (H, 4H)   W_hh^T
    b_ref:    (1, 4H)   b_ih + b_hh
    wlin_ref: (H, 128)  W_lin^T zero-padded to lane-dense 128
    blin_ref: (1, 128)  b_lin zero-padded to 128 lanes
    out_ref:  (B, 128)  logits in lanes [0:5], zeros elsewhere
    """
    # Hoisted input projection for all timesteps at once (one MXU pass over
    # T*B rows instead of T tiny matmuls), bias folded in: (T*B, 4H).
    xproj = (jnp.dot(x_ref[...], wih_ref[...],
                     preferred_element_type=jnp.float32) + b_ref[...])
    whh = whh_ref[...]          # (H, 4H), loop-invariant, loaded once

    h = jnp.zeros((B, H), jnp.float32)
    c = jnp.zeros((B, H), jnp.float32)

    # Fully unrolled static recurrence (T is a Python constant); only the
    # recurrent h @ W_hh^T matmul remains on the serial dependence chain.
    for t in range(T):
        gates = (xproj[t * B:(t + 1) * B, :]
                 + jnp.dot(h, whh, preferred_element_type=jnp.float32))
        i_g = jax.nn.sigmoid(gates[:, 0:H])
        f_g = jax.nn.sigmoid(gates[:, H:2 * H])
        g_g = jnp.tanh(gates[:, 2 * H:3 * H])
        o_g = jax.nn.sigmoid(gates[:, 3 * H:4 * H])
        c = f_g * c + i_g * g_g
        h = o_g * jnp.tanh(c)

    # Linear head on the last hidden state; lane-dense (128-wide) store.
    out_ref[...] = (jnp.dot(h, wlin_ref[...],
                            preferred_element_type=jnp.float32) + blin_ref[...])


def lstm_glove_forward(token_ids, lengths, glove, w_ih, w_hh, b_ih, b_hh,
                       w_lin, b_lin):
    """token_ids: (B, T) int32. Returns (B, 5) float32.

    `lengths` is accepted for API parity with the PyTorch forward(x, l); the
    original module also ignores it (full-length LSTM, ht[-1] taken).
    """
    del lengths
    B, T = token_ids.shape
    V, E = glove.shape
    H = w_hh.shape[1]
    OUT = w_lin.shape[0]
    OUT_PAD = 128        # lane-dense padded output width

    # ---- glue: embedding gather (frozen table); Dropout(0.2) = identity at eval ----
    # TODO(synk): training-mode Dropout(0.2) not implemented (inference identity).
    x_emb = jnp.take(glove, token_ids, axis=0)                  # (B, T, E)
    x_flat = jnp.transpose(x_emb, (1, 0, 2)).reshape(T * B, E)  # time-major rows

    # ---- glue: weight re-layout for in-kernel row-major matmuls ----
    wih_t = jnp.transpose(w_ih)                                 # (E, 4H)
    whh_t = jnp.transpose(w_hh)                                 # (H, 4H)
    bias = (b_ih + b_hh).reshape(1, 4 * H)                      # (1, 4H)
    wlin_pad = jnp.zeros((H, OUT_PAD), jnp.float32).at[:, :OUT].set(
        jnp.transpose(w_lin))                                   # (H, 128)
    blin_pad = jnp.zeros((1, OUT_PAD), jnp.float32).at[:, :OUT].set(b_lin)

    kernel = functools.partial(_lstm_kernel, T=T, B=B, H=H)
    vmem = pltpu.MemorySpace.VMEM
    out_pad = pl.pallas_call(
        kernel,
        out_shape=jax.ShapeDtypeStruct((B, OUT_PAD), jnp.float32),
        in_specs=[pl.BlockSpec(memory_space=vmem)] * 6,
        out_specs=pl.BlockSpec(memory_space=vmem),
    )(x_flat, wih_t, whh_t, bias, wlin_pad, blin_pad)
    return out_pad[:, :OUT]


def reference_forward(token_ids, glove, w_ih, w_hh, b_ih, b_hh, w_lin, b_lin):
    """Pure-JAX reference matching torch.nn.LSTM semantics (batch_first)."""
    B, T = token_ids.shape
    H = w_hh.shape[1]
    x_emb = jnp.take(glove, token_ids, axis=0)           # (B, T, E)

    def step(carry, x_t):
        h, c = carry
        gates = x_t @ w_ih.T + b_ih + h @ w_hh.T + b_hh
        i_g = jax.nn.sigmoid(gates[:, 0:H])
        f_g = jax.nn.sigmoid(gates[:, H:2 * H])
        g_g = jnp.tanh(gates[:, 2 * H:3 * H])
        o_g = jax.nn.sigmoid(gates[:, 3 * H:4 * H])
        c_new = f_g * c + i_g * g_g
        h_new = o_g * jnp.tanh(c_new)
        return (h_new, c_new), h_new

    h0 = jnp.zeros((B, H), jnp.float32)
    c0 = jnp.zeros((B, H), jnp.float32)
    (h_T, _), _ = lax.scan(step, (h0, c0), jnp.transpose(x_emb, (1, 0, 2)))
    return h_T @ w_lin.T + b_lin


if __name__ == "__main__":
    # Small shapes consistent with the module:
    #   vocab=64, embedding_dim=128, hidden_dim=32, batch=2, seq_len=8
    V, E, H = 64, 128, 32
    B, T = 2, 8

    key = jax.random.PRNGKey(0)
    k = jax.random.split(key, 8)

    glove = jax.random.normal(k[0], (V, E), jnp.float32) * 0.1     # frozen glove table
    w_ih = jax.random.normal(k[1], (4 * H, E), jnp.float32) * 0.1  # nn.LSTM weight_ih_l0
    w_hh = jax.random.normal(k[2], (4 * H, H), jnp.float32) * 0.1  # nn.LSTM weight_hh_l0
    b_ih = jax.random.normal(k[3], (4 * H,), jnp.float32) * 0.1
    b_hh = jax.random.normal(k[4], (4 * H,), jnp.float32) * 0.1
    w_lin = jax.random.normal(k[5], (5, H), jnp.float32) * 0.1     # nn.Linear(H, 5)
    b_lin = jax.random.normal(k[6], (5,), jnp.float32) * 0.1

    token_ids = jax.random.randint(k[7], (B, T), 0, V, jnp.int32)
    lengths = jnp.full((B,), T, jnp.int32)   # unused (parity with forward(x, l))

    out = lstm_glove_forward(token_ids, lengths, glove, w_ih, w_hh,
                             b_ih, b_hh, w_lin, b_lin)
    out = jax.block_until_ready(out)

    ref = reference_forward(token_ids, glove, w_ih, w_hh, b_ih, b_hh,
                            w_lin, b_lin)
    assert out.shape == (B, 5)
    assert jnp.allclose(out, ref, atol=1e-5, rtol=1e-5), (out, ref)
    print("KERNEL_OK")
</pallas_src>

<mosaic_0001>
module attributes {stable_mosaic.version = 11 : i64} {
  func.func @_lstm_kernel(%arg0: memref<16x128xf32, #tpu.memory_space<vmem>>, %arg1: memref<128x128xf32, #tpu.memory_space<vmem>>, %arg2: memref<32x128xf32, #tpu.memory_space<vmem>>, %arg3: memref<1x128xf32, #tpu.memory_space<vmem>>, %arg4: memref<32x128xf32, #tpu.memory_space<vmem>>, %arg5: memref<1x128xf32, #tpu.memory_space<vmem>>, %arg6: memref<2x128xf32, #tpu.memory_space<vmem>>) attributes {dimension_semantics = [], scalar_prefetch = 0 : i64, scratch_operands = 0 : i64, tpu.core_type = #tpu.core_type<tc>} {
    %c0 = arith.constant 0 : index
    %c0_0 = arith.constant 0 : index
    %0 = vector.load %arg0[%c0, %c0_0] : memref<16x128xf32, #tpu.memory_space<vmem>>, vector<16x128xf32>
    %c0_1 = arith.constant 0 : index
    %c0_2 = arith.constant 0 : index
    %1 = vector.load %arg1[%c0_1, %c0_2] : memref<128x128xf32, #tpu.memory_space<vmem>>, vector<128x128xf32>
    %cst = arith.constant dense<0.000000e+00> : vector<16x128xf32>
    %2 = tpu.matmul %0, %1, %cst {dimension_numbers = #tpu.dot_dimension_numbers<[1], [0], [0], [1], [0, 0, 1, 1], [], []>} : vector<16x128xf32>, vector<128x128xf32>, vector<16x128xf32> -> vector<16x128xf32>
    %c0_3 = arith.constant 0 : index
    %c0_4 = arith.constant 0 : index
    %3 = vector.load %arg3[%c0_3, %c0_4] : memref<1x128xf32, #tpu.memory_space<vmem>>, vector<1x128xf32>
    %4 = vector.broadcast %3 : vector<1x128xf32> to vector<16x128xf32>
    %5 = arith.addf %2, %4 : vector<16x128xf32>
    %c0_5 = arith.constant 0 : index
    %c0_6 = arith.constant 0 : index
    %6 = vector.load %arg2[%c0_5, %c0_6] : memref<32x128xf32, #tpu.memory_space<vmem>>, vector<32x128xf32>
    %cst_7 = arith.constant 0.000000e+00 : f32
    %7 = vector.broadcast %cst_7 : f32 to vector<2x32xf32>
    %cst_8 = arith.constant 0.000000e+00 : f32
    %8 = vector.broadcast %cst_8 : f32 to vector<2x32xf32>
    %9 = vector.extract_strided_slice %5 {offsets = [0, 0], sizes = [2, 128], strides = [1, 1]} : vector<16x128xf32> to vector<2x128xf32>
    %cst_9 = arith.constant dense<0.000000e+00> : vector<2x128xf32>
    %10 = tpu.matmul %7, %6, %cst_9 {dimension_numbers = #tpu.dot_dimension_numbers<[1], [0], [0], [1], [0, 0, 1, 1], [], []>} : vector<2x32xf32>, vector<32x128xf32>, vector<2x128xf32> -> vector<2x128xf32>
    %11 = arith.addf %9, %10 : vector<2x128xf32>
    %12 = vector.extract_strided_slice %11 {offsets = [0, 0], sizes = [2, 32], strides = [1, 1]} : vector<2x128xf32> to vector<2x32xf32>
    %13 = arith.negf %12 : vector<2x32xf32>
    %14 = math.exp %13 : vector<2x32xf32>
    %cst_10 = arith.constant 1.000000e+00 : f32
    %15 = vector.broadcast %cst_10 : f32 to vector<2x32xf32>
    %16 = arith.addf %15, %14 : vector<2x32xf32>
    %17 = arith.divf %15, %16 : vector<2x32xf32>
    %18 = vector.extract_strided_slice %11 {offsets = [0, 32], sizes = [2, 32], strides = [1, 1]} : vector<2x128xf32> to vector<2x32xf32>
    %19 = arith.negf %18 : vector<2x32xf32>
    %20 = math.exp %19 : vector<2x32xf32>
    %cst_11 = arith.constant 1.000000e+00 : f32
    %21 = vector.broadcast %cst_11 : f32 to vector<2x32xf32>
    %22 = arith.addf %21, %20 : vector<2x32xf32>
    %23 = arith.divf %21, %22 : vector<2x32xf32>
    %24 = vector.extract_strided_slice %11 {offsets = [0, 64], sizes = [2, 32], strides = [1, 1]} : vector<2x128xf32> to vector<2x32xf32>
    %25 = math.tanh %24 : vector<2x32xf32>
    %26 = vector.extract_strided_slice %11 {offsets = [0, 96], sizes = [2, 32], strides = [1, 1]} : vector<2x128xf32> to vector<2x32xf32>
    %27 = arith.negf %26 : vector<2x32xf32>
    %28 = math.exp %27 : vector<2x32xf32>
    %cst_12 = arith.constant 1.000000e+00 : f32
    %29 = vector.broadcast %cst_12 : f32 to vector<2x32xf32>
    %30 = arith.addf %29, %28 : vector<2x32xf32>
    %31 = arith.divf %29, %30 : vector<2x32xf32>
    %32 = arith.mulf %23, %8 : vector<2x32xf32>
    %33 = arith.mulf %17, %25 : vector<2x32xf32>
    %34 = arith.addf %32, %33 : vector<2x32xf32>
    %35 = math.tanh %34 : vector<2x32xf32>
    %36 = arith.mulf %31, %35 : vector<2x32xf32>
    %37 = vector.extract_strided_slice %5 {offsets = [2, 0], sizes = [2, 128], strides = [1, 1]} : vector<16x128xf32> to vector<2x128xf32>
    %cst_13 = arith.constant dense<0.000000e+00> : vector<2x128xf32>
    %38 = tpu.matmul %36, %6, %cst_13 {dimension_numbers = #tpu.dot_dimension_numbers<[1], [0], [0], [1], [0, 0, 1, 1], [], []>} : vector<2x32xf32>, vector<32x128xf32>, vector<2x128xf32> -> vector<2x128xf32>
    %39 = arith.addf %37, %38 : vector<2x128xf32>
    %40 = vector.extract_strided_slice %39 {offsets = [0, 0], sizes = [2, 32], strides = [1, 1]} : vector<2x128xf32> to vector<2x32xf32>
    %41 = arith.negf %40 : vector<2x32xf32>
    %42 = math.exp %41 : vector<2x32xf32>
    %cst_14 = arith.constant 1.000000e+00 : f32
    %43 = vector.broadcast %cst_14 : f32 to vector<2x32xf32>
    %44 = arith.addf %43, %42 : vector<2x32xf32>
    %45 = arith.divf %43, %44 : vector<2x32xf32>
    %46 = vector.extract_strided_slice %39 {offsets = [0, 32], sizes = [2, 32], strides = [1, 1]} : vector<2x128xf32> to vector<2x32xf32>
    %47 = arith.negf %46 : vector<2x32xf32>
    %48 = math.exp %47 : vector<2x32xf32>
    %cst_15 = arith.constant 1.000000e+00 : f32
    %49 = vector.broadcast %cst_15 : f32 to vector<2x32xf32>
    %50 = arith.addf %49, %48 : vector<2x32xf32>
    %51 = arith.divf %49, %50 : vector<2x32xf32>
    %52 = vector.extract_strided_slice %39 {offsets = [0, 64], sizes = [2, 32], strides = [1, 1]} : vector<2x128xf32> to vector<2x32xf32>
    %53 = math.tanh %52 : vector<2x32xf32>
    %54 = vector.extract_strided_slice %39 {offsets = [0, 96], sizes = [2, 32], strides = [1, 1]} : vector<2x128xf32> to vector<2x32xf32>
    %55 = arith.negf %54 : vector<2x32xf32>
    %56 = math.exp %55 : vector<2x32xf32>
    %cst_16 = arith.constant 1.000000e+00 : f32
    %57 = vector.broadcast %cst_16 : f32 to vector<2x32xf32>
    %58 = arith.addf %57, %56 : vector<2x32xf32>
    %59 = arith.divf %57, %58 : vector<2x32xf32>
    %60 = arith.mulf %51, %34 : vector<2x32xf32>
    %61 = arith.mulf %45, %53 : vector<2x32xf32>
    %62 = arith.addf %60, %61 : vector<2x32xf32>
    %63 = math.tanh %62 : vector<2x32xf32>
    %64 = arith.mulf %59, %63 : vector<2x32xf32>
    %65 = vector.extract_strided_slice %5 {offsets = [4, 0], sizes = [2, 128], strides = [1, 1]} : vector<16x128xf32> to vector<2x128xf32>
    %cst_17 = arith.constant dense<0.000000e+00> : vector<2x128xf32>
    %66 = tpu.matmul %64, %6, %cst_17 {dimension_numbers = #tpu.dot_dimension_numbers<[1], [0], [0], [1], [0, 0, 1, 1], [], []>} : vector<2x32xf32>, vector<32x128xf32>, vector<2x128xf32> -> vector<2x128xf32>
    %67 = arith.addf %65, %66 : vector<2x128xf32>
    %68 = vector.extract_strided_slice %67 {offsets = [0, 0], sizes = [2, 32], strides = [1, 1]} : vector<2x128xf32> to vector<2x32xf32>
    %69 = arith.negf %68 : vector<2x32xf32>
    %70 = math.exp %69 : vector<2x32xf32>
    %cst_18 = arith.constant 1.000000e+00 : f32
    %71 = vector.broadcast %cst_18 : f32 to vector<2x32xf32>
    %72 = arith.addf %71, %70 : vector<2x32xf32>
    %73 = arith.divf %71, %72 : vector<2x32xf32>
    %74 = vector.extract_strided_slice %67 {offsets = [0, 32], sizes = [2, 32], strides = [1, 1]} : vector<2x128xf32> to vector<2x32xf32>
    %75 = arith.negf %74 : vector<2x32xf32>
    %76 = math.exp %75 : vector<2x32xf32>
    %cst_19 = arith.constant 1.000000e+00 : f32
    %77 = vector.broadcast %cst_19 : f32 to vector<2x32xf32>
    %78 = arith.addf %77, %76 : vector<2x32xf32>
    %79 = arith.divf %77, %78 : vector<2x32xf32>
    %80 = vector.extract_strided_slice %67 {offsets = [0, 64], sizes = [2, 32], strides = [1, 1]} : vector<2x128xf32> to vector<2x32xf32>
    %81 = math.tanh %80 : vector<2x32xf32>
    %82 = vector.extract_strided_slice %67 {offsets = [0, 96], sizes = [2, 32], strides = [1, 1]} : vector<2x128xf32> to vector<2x32xf32>
    %83 = arith.negf %82 : vector<2x32xf32>
    %84 = math.exp %83 : vector<2x32xf32>
    %cst_20 = arith.constant 1.000000e+00 : f32
    %85 = vector.broadcast %cst_20 : f32 to vector<2x32xf32>
    %86 = arith.addf %85, %84 : vector<2x32xf32>
    %87 = arith.divf %85, %86 : vector<2x32xf32>
    %88 = arith.mulf %79, %62 : vector<2x32xf32>
    %89 = arith.mulf %73, %81 : vector<2x32xf32>
    %90 = arith.addf %88, %89 : vector<2x32xf32>
    %91 = math.tanh %90 : vector<2x32xf32>
    %92 = arith.mulf %87, %91 : vector<2x32xf32>
    %93 = vector.extract_strided_slice %5 {offsets = [6, 0], sizes = [2, 128], strides = [1, 1]} : vector<16x128xf32> to vector<2x128xf32>
    %cst_21 = arith.constant dense<0.000000e+00> : vector<2x128xf32>
    %94 = tpu.matmul %92, %6, %cst_21 {dimension_numbers = #tpu.dot_dimension_numbers<[1], [0], [0], [1], [0, 0, 1, 1], [], []>} : vector<2x32xf32>, vector<32x128xf32>, vector<2x128xf32> -> vector<2x128xf32>
    %95 = arith.addf %93, %94 : vector<2x128xf32>
    %96 = vector.extract_strided_slice %95 {offsets = [0, 0], sizes = [2, 32], strides = [1, 1]} : vector<2x128xf32> to vector<2x32xf32>
    %97 = arith.negf %96 : vector<2x32xf32>
    %98 = math.exp %97 : vector<2x32xf32>
    %cst_22 = arith.constant 1.000000e+00 : f32
    %99 = vector.broadcast %cst_22 : f32 to vector<2x32xf32>
    %100 = arith.addf %99, %98 : vector<2x32xf32>
    %101 = arith.divf %99, %100 : vector<2x32xf32>
    %102 = vector.extract_strided_slice %95 {offsets = [0, 32], sizes = [2, 32], strides = [1, 1]} : vector<2x128xf32> to vector<2x32xf32>
    %103 = arith.negf %102 : vector<2x32xf32>
    %104 = math.exp %103 : vector<2x32xf32>
    %cst_23 = arith.constant 1.000000e+00 : f32
    %105 = vector.broadcast %cst_23 : f32 to vector<2x32xf32>
    %106 = arith.addf %105, %104 : vector<2x32xf32>
    %107 = arith.divf %105, %106 : vector<2x32xf32>
    %108 = vector.extract_strided_slice %95 {offsets = [0, 64], sizes = [2, 32], strides = [1, 1]} : vector<2x128xf32> to vector<2x32xf32>
    %109 = math.tanh %108 : vector<2x32xf32>
    %110 = vector.extract_strided_slice %95 {offsets = [0, 96], sizes = [2, 32], strides = [1, 1]} : vector<2x128xf32> to vector<2x32xf32>
    %111 = arith.negf %110 : vector<2x32xf32>
    %112 = math.exp %111 : vector<2x32xf32>
    %cst_24 = arith.constant 1.000000e+00 : f32
    %113 = vector.broadcast %cst_24 : f32 to vector<2x32xf32>
    %114 = arith.addf %113, %112 : vector<2x32xf32>
    %115 = arith.divf %113, %114 : vector<2x32xf32>
    %116 = arith.mulf %107, %90 : vector<2x32xf32>
    %117 = arith.mulf %101, %109 : vector<2x32xf32>
    %118 = arith.addf %116, %117 : vector<2x32xf32>
    %119 = math.tanh %118 : vector<2x32xf32>
    %120 = arith.mulf %115, %119 : vector<2x32xf32>
    %121 = vector.extract_strided_slice %5 {offsets = [8, 0], sizes = [2, 128], strides = [1, 1]} : vector<16x128xf32> to vector<2x128xf32>
    %cst_25 = arith.constant dense<0.000000e+00> : vector<2x128xf32>
    %122 = tpu.matmul %120, %6, %cst_25 {dimension_numbers = #tpu.dot_dimension_numbers<[1], [0], [0], [1], [0, 0, 1, 1], [], []>} : vector<2x32xf32>, vector<32x128xf32>, vector<2x128xf32> -> vector<2x128xf32>
    %123 = arith.addf %121, %122 : vector<2x128xf32>
    %124 = vector.extract_strided_slice %123 {offsets = [0, 0], sizes = [2, 32], strides = [1, 1]} : vector<2x128xf32> to vector<2x32xf32>
    %125 = arith.negf %124 : vector<2x32xf32>
    %126 = math.exp %125 : vector<2x32xf32>
    %cst_26 = arith.constant 1.000000e+00 : f32
    %127 = vector.broadcast %cst_26 : f32 to vector<2x32xf32>
    %128 = arith.addf %127, %126 : vector<2x32xf32>
    %129 = arith.divf %127, %128 : vector<2x32xf32>
    %130 = vector.extract_strided_slice %123 {offsets = [0, 32], sizes = [2, 32], strides = [1, 1]} : vector<2x128xf32> to vector<2x32xf32>
    %131 = arith.negf %130 : vector<2x32xf32>
    %132 = math.exp %131 : vector<2x32xf32>
    %cst_27 = arith.constant 1.000000e+00 : f32
    %133 = vector.broadcast %cst_27 : f32 to vector<2x32xf32>
    %134 = arith.addf %133, %132 : vector<2x32xf32>
    %135 = arith.divf %133, %134 : vector<2x32xf32>
    %136 = vector.extract_strided_slice %123 {offsets = [0, 64], sizes = [2, 32], strides = [1, 1]} : vector<2x128xf32> to vector<2x32xf32>
    %137 = math.tanh %136 : vector<2x32xf32>
    %138 = vector.extract_strided_slice %123 {offsets = [0, 96], sizes = [2, 32], strides = [1, 1]} : vector<2x128xf32> to vector<2x32xf32>
    %139 = arith.negf %138 : vector<2x32xf32>
    %140 = math.exp %139 : vector<2x32xf32>
    %cst_28 = arith.constant 1.000000e+00 : f32
    %141 = vector.broadcast %cst_28 : f32 to vector<2x32xf32>
    %142 = arith.addf %141, %140 : vector<2x32xf32>
    %143 = arith.divf %141, %142 : vector<2x32xf32>
    %144 = arith.mulf %135, %118 : vector<2x32xf32>
    %145 = arith.mulf %129, %137 : vector<2x32xf32>
    %146 = arith.addf %144, %145 : vector<2x32xf32>
    %147 = math.tanh %146 : vector<2x32xf32>
    %148 = arith.mulf %143, %147 : vector<2x32xf32>
    %149 = vector.extract_strided_slice %5 {offsets = [10, 0], sizes = [2, 128], strides = [1, 1]} : vector<16x128xf32> to vector<2x128xf32>
    %cst_29 = arith.constant dense<0.000000e+00> : vector<2x128xf32>
    %150 = tpu.matmul %148, %6, %cst_29 {dimension_numbers = #tpu.dot_dimension_numbers<[1], [0], [0], [1], [0, 0, 1, 1], [], []>} : vector<2x32xf32>, vector<32x128xf32>, vector<2x128xf32> -> vector<2x128xf32>
    %151 = arith.addf %149, %150 : vector<2x128xf32>
    %152 = vector.extract_strided_slice %151 {offsets = [0, 0], sizes = [2, 32], strides = [1, 1]} : vector<2x128xf32> to vector<2x32xf32>
    %153 = arith.negf %152 : vector<2x32xf32>
    %154 = math.exp %153 : vector<2x32xf32>
    %cst_30 = arith.constant 1.000000e+00 : f32
    %155 = vector.broadcast %cst_30 : f32 to vector<2x32xf32>
    %156 = arith.addf %155, %154 : vector<2x32xf32>
    %157 = arith.divf %155, %156 : vector<2x32xf32>
    %158 = vector.extract_strided_slice %151 {offsets = [0, 32], sizes = [2, 32], strides = [1, 1]} : vector<2x128xf32> to vector<2x32xf32>
    %159 = arith.negf %158 : vector<2x32xf32>
    %160 = math.exp %159 : vector<2x32xf32>
    %cst_31 = arith.constant 1.000000e+00 : f32
    %161 = vector.broadcast %cst_31 : f32 to vector<2x32xf32>
    %162 = arith.addf %161, %160 : vector<2x32xf32>
    %163 = arith.divf %161, %162 : vector<2x32xf32>
    %164 = vector.extract_strided_slice %151 {offsets = [0, 64], sizes = [2, 32], strides = [1, 1]} : vector<2x128xf32> to vector<2x32xf32>
    %165 = math.tanh %164 : vector<2x32xf32>
    %166 = vector.extract_strided_slice %151 {offsets = [0, 96], sizes = [2, 32], strides = [1, 1]} : vector<2x128xf32> to vector<2x32xf32>
    %167 = arith.negf %166 : vector<2x32xf32>
    %168 = math.exp %167 : vector<2x32xf32>
    %cst_32 = arith.constant 1.000000e+00 : f32
    %169 = vector.broadcast %cst_32 : f32 to vector<2x32xf32>
    %170 = arith.addf %169, %168 : vector<2x32xf32>
    %171 = arith.divf %169, %170 : vector<2x32xf32>
    %172 = arith.mulf %163, %146 : vector<2x32xf32>
    %173 = arith.mulf %157, %165 : vector<2x32xf32>
    %174 = arith.addf %172, %173 : vector<2x32xf32>
    %175 = math.tanh %174 : vector<2x32xf32>
    %176 = arith.mulf %171, %175 : vector<2x32xf32>
    %177 = vector.extract_strided_slice %5 {offsets = [12, 0], sizes = [2, 128], strides = [1, 1]} : vector<16x128xf32> to vector<2x128xf32>
    %cst_33 = arith.constant dense<0.000000e+00> : vector<2x128xf32>
    %178 = tpu.matmul %176, %6, %cst_33 {dimension_numbers = #tpu.dot_dimension_numbers<[1], [0], [0], [1], [0, 0, 1, 1], [], []>} : vector<2x32xf32>, vector<32x128xf32>, vector<2x128xf32> -> vector<2x128xf32>
    %179 = arith.addf %177, %178 : vector<2x128xf32>
    %180 = vector.extract_strided_slice %179 {offsets = [0, 0], sizes = [2, 32], strides = [1, 1]} : vector<2x128xf32> to vector<2x32xf32>
    %181 = arith.negf %180 : vector<2x32xf32>
    %182 = math.exp %181 : vector<2x32xf32>
    %cst_34 = arith.constant 1.000000e+00 : f32
    %183 = vector.broadcast %cst_34 : f32 to vector<2x32xf32>
    %184 = arith.addf %183, %182 : vector<2x32xf32>
    %185 = arith.divf %183, %184 : vector<2x32xf32>
    %186 = vector.extract_strided_slice %179 {offsets = [0, 32], sizes = [2, 32], strides = [1, 1]} : vector<2x128xf32> to vector<2x32xf32>
    %187 = arith.negf %186 : vector<2x32xf32>
    %188 = math.exp %187 : vector<2x32xf32>
    %cst_35 = arith.constant 1.000000e+00 : f32
    %189 = vector.broadcast %cst_35 : f32 to vector<2x32xf32>
    %190 = arith.addf %189, %188 : vector<2x32xf32>
    %191 = arith.divf %189, %190 : vector<2x32xf32>
    %192 = vector.extract_strided_slice %179 {offsets = [0, 64], sizes = [2, 32], strides = [1, 1]} : vector<2x128xf32> to vector<2x32xf32>
    %193 = math.tanh %192 : vector<2x32xf32>
    %194 = vector.extract_strided_slice %179 {offsets = [0, 96], sizes = [2, 32], strides = [1, 1]} : vector<2x128xf32> to vector<2x32xf32>
    %195 = arith.negf %194 : vector<2x32xf32>
    %196 = math.exp %195 : vector<2x32xf32>
    %cst_36 = arith.constant 1.000000e+00 : f32
    %197 = vector.broadcast %cst_36 : f32 to vector<2x32xf32>
    %198 = arith.addf %197, %196 : vector<2x32xf32>
    %199 = arith.divf %197, %198 : vector<2x32xf32>
    %200 = arith.mulf %191, %174 : vector<2x32xf32>
    %201 = arith.mulf %185, %193 : vector<2x32xf32>
    %202 = arith.addf %200, %201 : vector<2x32xf32>
    %203 = math.tanh %202 : vector<2x32xf32>
    %204 = arith.mulf %199, %203 : vector<2x32xf32>
    %205 = vector.extract_strided_slice %5 {offsets = [14, 0], sizes = [2, 128], strides = [1, 1]} : vector<16x128xf32> to vector<2x128xf32>
    %cst_37 = arith.constant dense<0.000000e+00> : vector<2x128xf32>
    %206 = tpu.matmul %204, %6, %cst_37 {dimension_numbers = #tpu.dot_dimension_numbers<[1], [0], [0], [1], [0, 0, 1, 1], [], []>} : vector<2x32xf32>, vector<32x128xf32>, vector<2x128xf32> -> vector<2x128xf32>
    %207 = arith.addf %205, %206 : vector<2x128xf32>
    %208 = vector.extract_strided_slice %207 {offsets = [0, 0], sizes = [2, 32], strides = [1, 1]} : vector<2x128xf32> to vector<2x32xf32>
    %209 = arith.negf %208 : vector<2x32xf32>
    %210 = math.exp %209 : vector<2x32xf32>
    %cst_38 = arith.constant 1.000000e+00 : f32
    %211 = vector.broadcast %cst_38 : f32 to vector<2x32xf32>
    %212 = arith.addf %211, %210 : vector<2x32xf32>
    %213 = arith.divf %211, %212 : vector<2x32xf32>
    %214 = vector.extract_strided_slice %207 {offsets = [0, 32], sizes = [2, 32], strides = [1, 1]} : vector<2x128xf32> to vector<2x32xf32>
    %215 = arith.negf %214 : vector<2x32xf32>
    %216 = math.exp %215 : vector<2x32xf32>
    %cst_39 = arith.constant 1.000000e+00 : f32
    %217 = vector.broadcast %cst_39 : f32 to vector<2x32xf32>
    %218 = arith.addf %217, %216 : vector<2x32xf32>
    %219 = arith.divf %217, %218 : vector<2x32xf32>
    %220 = vector.extract_strided_slice %207 {offsets = [0, 64], sizes = [2, 32], strides = [1, 1]} : vector<2x128xf32> to vector<2x32xf32>
    %221 = math.tanh %220 : vector<2x32xf32>
    %222 = vector.extract_strided_slice %207 {offsets = [0, 96], sizes = [2, 32], strides = [1, 1]} : vector<2x128xf32> to vector<2x32xf32>
    %223 = arith.negf %222 : vector<2x32xf32>
    %224 = math.exp %223 : vector<2x32xf32>
    %cst_40 = arith.constant 1.000000e+00 : f32
    %225 = vector.broadcast %cst_40 : f32 to vector<2x32xf32>
    %226 = arith.addf %225, %224 : vector<2x32xf32>
    %227 = arith.divf %225, %226 : vector<2x32xf32>
    %228 = arith.mulf %219, %202 : vector<2x32xf32>
    %229 = arith.mulf %213, %221 : vector<2x32xf32>
    %230 = arith.addf %228, %229 : vector<2x32xf32>
    %231 = math.tanh %230 : vector<2x32xf32>
    %232 = arith.mulf %227, %231 : vector<2x32xf32>
    %c0_41 = arith.constant 0 : index
    %c0_42 = arith.constant 0 : index
    %233 = vector.load %arg4[%c0_41, %c0_42] : memref<32x128xf32, #tpu.memory_space<vmem>>, vector<32x128xf32>
    %cst_43 = arith.constant dense<0.000000e+00> : vector<2x128xf32>
    %234 = tpu.matmul %232, %233, %cst_43 {dimension_numbers = #tpu.dot_dimension_numbers<[1], [0], [0], [1], [0, 0, 1, 1], [], []>} : vector<2x32xf32>, vector<32x128xf32>, vector<2x128xf32> -> vector<2x128xf32>
    %c0_44 = arith.constant 0 : index
    %c0_45 = arith.constant 0 : index
    %235 = vector.load %arg5[%c0_44, %c0_45] : memref<1x128xf32, #tpu.memory_space<vmem>>, vector<1x128xf32>
    %236 = vector.broadcast %235 : vector<1x128xf32> to vector<2x128xf32>
    %237 = arith.addf %234, %236 : vector<2x128xf32>
    %c0_46 = arith.constant 0 : index
    %c0_47 = arith.constant 0 : index
    %238 = vector.load %arg6[%c0_46, %c0_47] : memref<2x128xf32, #tpu.memory_space<vmem>>, vector<2x128xf32>
    tpu.vector_store %arg6[%c0_46, %c0_47], %237 {strides = array<i32>} : memref<2x128xf32, #tpu.memory_space<vmem>>, vector<2x128xf32>,
    return
  }
}

</mosaic_0001>

<llo_original>
// kernel: tpu_custom_call.1
$region0: #{tpu_custom_call.1}
  #allocation0 [shape = 'u32[]', space=smem, size = 0x4, offset = 0x4, fixed_abs, tag = 'smem constant byte address 0x4 - core index']
  #allocation1 [shape = 'u32[72,128]{1,0:T(1,128)}', space=vmem, size = 0x9000, scoped, tag = 'internal scratch']
  %s0 = inlined_call_operand.hbm [shape: f32[16,128], index: 0, kind: input, shape index: {}]
  %s1 = inlined_call_operand.hbm [shape: f32[128,128], index: 1, kind: input, shape index: {}]
  %s2 = inlined_call_operand.hbm [shape: f32[32,128], index: 2, kind: input, shape index: {}]
  %s3 = inlined_call_operand.vmem [shape: f32[1,128], index: 3, kind: input, shape index: {}]
  %s4 = inlined_call_operand.hbm [shape: f32[32,128], index: 4, kind: input, shape index: {}]
  %s5 = inlined_call_operand.vmem [shape: f32[1,128], index: 5, kind: input, shape index: {}]
  %s6 = inlined_call_operand.hbm [shape: f32[2,128], index: 6, kind: output, shape index: {}]
  %s7 = sld [smem:[#allocation0]]
  $region50: #{tpu_custom_call.1} parent=0
    _
  %s9 = ssub.s32 1, %s7
  %s10 = scalar_select 0, %s9, %s7
  $region1: #{tpu_custom_call.1} parent=0
    #allocation2 [shape = 'u8[8192]{0}', space=vmem, size = 0x2000, scoped, tag = 'input window, operand 0, single buffered']
    #allocation3 [shape = 's32[1]{0}', space=sflag, size = 0x4, scoped, tag = 'scoped memory for tpu_custom_call.1']
    #allocation4 [shape = 's32[1]{0}', space=sflag, size = 0x4, scoped, tag = 'scoped memory for tpu_custom_call.1']
    #allocation5 [shape = 'u8[65536]{0}', space=vmem, size = 0x10000, scoped, tag = 'input window, operand 1, single buffered']
    #allocation6 [shape = 's32[1]{0}', space=sflag, size = 0x4, scoped, tag = 'scoped memory for tpu_custom_call.1']
    #allocation7 [shape = 'u8[16384]{0}', space=vmem, size = 0x4000, scoped, tag = 'input window, operand 2, single buffered']
    #allocation8 [shape = 'u8[16384]{0}', space=vmem, size = 0x4000, scoped, tag = 'input window, operand 4, single buffered']
    #allocation9 [shape = 's32[1]{0}', space=sflag, size = 0x4, scoped, tag = 'scoped memory for tpu_custom_call.1']
    #allocation10 [shape = 'u8[1024]{0}', space=vmem, size = 0x400, scoped, tag = 'output window, operand 0, single buffered']
    %11 = vsyncpa [#allocation3], 0
    %12 = vsyncpa [#allocation6], 0
    %13 = vsyncpa [#allocation9], 0
    %14 = vsyncpa [#allocation4], 0
    // Predicated region
    $region2: #{tpu_custom_call.1} parent=1 // pred_check
      _
    $region3: #{tpu_custom_call.1} parent=1 // pred_check_branch
      %16 = sbr.rel (0) target = $region5
    $region4: #{tpu_custom_call.1} parent=1 // pred_region
      %18 = vsyncadd [#allocation3], 0
      %s19 = sshll.u32 %s0, 4
      %s20 = int_to_ptr.hbm [resolvable:$true] %s19
      %s21 = sshll.u32 [#allocation2], 4
      %s22 = int_to_ptr.vmem [resolvable:$true] %s21
      %27 = dma.hbm_to_vmem [thread:$0]  %s20, 256, %s22, [#allocation3], 128, 128, 8
    $region5: #{tpu_custom_call.1} parent=1 // pred_fallthru
      _
    // Predicated region
    $region6: #{tpu_custom_call.1} parent=1 // pred_check
      _
    $region7: #{tpu_custom_call.1} parent=1 // pred_check_branch
      %29 = sbr.rel (0) target = $region9
    $region8: #{tpu_custom_call.1} parent=1 // pred_region
      %31 = vsyncadd [#allocation6], 0
      %s32 = sshll.u32 %s1, 4
      %s33 = int_to_ptr.hbm [resolvable:$true] %s32
      %s34 = sshll.u32 [#allocation5], 4
      %s35 = int_to_ptr.vmem [resolvable:$true] %s34
      %40 = dma.hbm_to_vmem [thread:$0]  %s33, 2048, %s35, [#allocation6], 128, 128, 8
    $region9: #{tpu_custom_call.1} parent=1 // pred_fallthru
      _
    // Predicated region
    $region10: #{tpu_custom_call.1} parent=1 // pred_check
      _
    $region11: #{tpu_custom_call.1} parent=1 // pred_check_branch
      %42 = sbr.rel (0) target = $region13
    $region12: #{tpu_custom_call.1} parent=1 // pred_region
      %44 = vsyncadd [#allocation6], 0
      %s45 = sshll.u32 %s2, 4
      %s46 = int_to_ptr.hbm [resolvable:$true] %s45
      %s47 = sshll.u32 [#allocation7], 4
      %s48 = int_to_ptr.vmem [resolvable:$true] %s47
      %53 = dma.hbm_to_vmem [thread:$0]  %s46, 512, %s48, [#allocation6], 128, 128, 8
    $region13: #{tpu_custom_call.1} parent=1 // pred_fallthru
      _
    // Predicated region
    $region14: #{tpu_custom_call.1} parent=1 // pred_check
      _
    $region15: #{tpu_custom_call.1} parent=1 // pred_check_branch
      %55 = sbr.rel (0) target = $region17
    $region16: #{tpu_custom_call.1} parent=1 // pred_region
      _
    $region17: #{tpu_custom_call.1} parent=1 // pred_fallthru
      _
    // Predicated region
    $region18: #{tpu_custom_call.1} parent=1 // pred_check
      _
    $region19: #{tpu_custom_call.1} parent=1 // pred_check_branch
      %57 = sbr.rel (0) target = $region21
    $region20: #{tpu_custom_call.1} parent=1 // pred_region
      %59 = vsyncadd [#allocation9], 0
      %s60 = sshll.u32 %s4, 4
      %s61 = int_to_ptr.hbm [resolvable:$true] %s60
      %s62 = sshll.u32 [#allocation8], 4
      %s63 = int_to_ptr.vmem [resolvable:$true] %s62
      %68 = dma.hbm_to_vmem [thread:$0]  %s61, 512, %s63, [#allocation9], 128, 128, 8
    $region21: #{tpu_custom_call.1} parent=1 // pred_fallthru
      _
    // Predicated region
    $region22: #{tpu_custom_call.1} parent=1 // pred_check
      _
    $region23: #{tpu_custom_call.1} parent=1 // pred_check_branch
      %70 = sbr.rel (0) target = $region25
    $region24: #{tpu_custom_call.1} parent=1 // pred_region
      _
    $region25: #{tpu_custom_call.1} parent=1 // pred_fallthru
      _
    // Predicated region
    $region26: #{tpu_custom_call.1} parent=1 // pred_check
      _
    $region27: #{tpu_custom_call.1} parent=1 // pred_check_branch
      %72 = sbr.rel (0) target = $region29
    $region28: #{tpu_custom_call.1} parent=1 // pred_region
      %74 = dma.done [#allocation3], 256
    $region29: #{tpu_custom_call.1} parent=1 // pred_fallthru
      _
    // Predicated region
    $region30: #{tpu_custom_call.1} parent=1 // pred_check
      _
    $region31: #{tpu_custom_call.1} parent=1 // pred_check_branch
      %76 = sbr.rel (0) target = $region33
    $region32: #{tpu_custom_call.1} parent=1 // pred_region
      %78 = dma.done [#allocation6], 2048
    $region33: #{tpu_custom_call.1} parent=1 // pred_fallthru
      _
    // Predicated region
    $region34: #{tpu_custom_call.1} parent=1 // pred_check
      _
    $region35: #{tpu_custom_call.1} parent=1 // pred_check_branch
      %80 = sbr.rel (0) target = $region37
    $region36: #{tpu_custom_call.1} parent=1 // pred_region
      %82 = dma.done [#allocation6], 512
    $region37: #{tpu_custom_call.1} parent=1 // pred_fallthru
      _
    // Predicated region
    $region38: #{tpu_custom_call.1} parent=1 // pred_check
      _
    $region39: #{tpu_custom_call.1} parent=1 // pred_check_branch
      %84 = sbr.rel (0) target = $region41
    $region40: #{tpu_custom_call.1} parent=1 // pred_region
      %86 = dma.done [#allocation9], 512
    $region41: #{tpu_custom_call.1} parent=1 // pred_fallthru
      _
    %v87 = vld [vmem:[#allocation2] sm:$0xff]
    %v88 = vld [vmem:[#allocation2 + $0x8] sm:$0xff]
    %v89 = vld [vmem:[#allocation5] sm:$0xff]
    %v90 = vld [vmem:[#allocation5 + $0x8] sm:$0xff]
    %v91 = vld [vmem:[#allocation5 + $0x10] sm:$0xff]
    %v92 = vld [vmem:[#allocation5 + $0x18] sm:$0xff]
    %v93 = vld [vmem:[#allocation5 + $0x20] sm:$0xff]
    %v94 = vld [vmem:[#allocation5 + $0x28] sm:$0xff]
    %v95 = vld [vmem:[#allocation5 + $0x30] sm:$0xff]
    %v96 = vld [vmem:[#allocation5 + $0x38] sm:$0xff]
    %v97 = vld [vmem:[#allocation5 + $0x40] sm:$0xff]
    %v98 = vld [vmem:[#allocation5 + $0x48] sm:$0xff]
    %v99 = vld [vmem:[#allocation5 + $0x50] sm:$0xff]
    %v100 = vld [vmem:[#allocation5 + $0x58] sm:$0xff]
    %v101 = vld [vmem:[#allocation5 + $0x60] sm:$0xff]
    %v102 = vld [vmem:[#allocation5 + $0x68] sm:$0xff]
    %v103 = vld [vmem:[#allocation5 + $0x70] sm:$0xff]
    %v104 = vld [vmem:[#allocation5 + $0x78] sm:$0xff]
    %v105 = vld [vmem:[%s3] sm:$0x1]
    %v107 = vperm.slane %v105, 0
    %109 = vmatpush.msra.mxu0 %v104
    %110 = vmatpush.msra.mxu0 %v103
    %111 = vmatpush.msra.mxu0 %v102
    %112 = vmatpush.msra.mxu0 %v101
    %113 = vmatpush.msra.mxu0 %v100
    %114 = vmatpush.msra.mxu0 %v99
    %115 = vmatpush.msra.mxu0 %v98
    %116 = vmatpush.msra.mxu0 %v97
    %117 = vmatpush.msra.mxu0 %v96
    %118 = vmatpush.msra.mxu0 %v95
    %119 = vmatpush.msra.mxu0 %v94
    %120 = vmatpush.msra.mxu0 %v93
    %121 = vmatpush.msra.mxu0 %v92
    %122 = vmatpush.msra.mxu0 %v91
    %123 = vmatpush.msra.mxu0 %v90
    %124 = vmatpush.msra.mxu0 %v89
    %125 = vmatmul.f32.gmra.mxu0 %v87
    %v126 = vpop.f32.mrf.mxu0
    %v127 = vadd.f32 %v107, %v126
    %128 = vmatmul.f32.gmra.mxu0 %v88
    %v129 = vpop.f32.mrf.mxu0
    %v130 = vadd.f32 %v107, %v129
    %131 = vdwg.mxu0
    %v132 = vld [vmem:[#allocation7] sm:$0xff]
    %v133 = vld [vmem:[#allocation7 + $0x8] sm:$0xff]
    %v134 = vld [vmem:[#allocation7 + $0x10] sm:$0xff]
    %v135 = vld [vmem:[#allocation7 + $0x18] sm:$0xff]
    %vm136 = vcmask 261120
    %v138 = vsel %vm136, 0.0, 0
    %140 = vmatpush.msra.mxu0 0.0
    %141 = vmatpush.msra.mxu0 0.0
    %142 = vmatpush.msra.mxu0 0.0
    %143 = vmatpush.msra.mxu0 0.0
    %144 = vmatpush.msra.mxu0 0.0
    %145 = vmatpush.msra.mxu0 0.0
    %146 = vmatpush.msra.mxu0 0.0
    %147 = vmatpush.msra.mxu0 0.0
    %148 = vmatpush.msra.mxu0 0.0
    %149 = vmatpush.msra.mxu0 0.0
    %150 = vmatpush.msra.mxu0 0.0
    %151 = vmatpush.msra.mxu0 0.0
    %152 = vmatpush.msra.mxu0 %v135
    %153 = vmatpush.msra.mxu0 %v134
    %154 = vmatpush.msra.mxu0 %v133
    %155 = vmatpush.msra.mxu0 %v132
    %156 = vmatmul.f32.gmra.mxu0 %v138
    %v157 = vpop.f32.mrf.mxu0
    %v158 = vadd.f32 0.0, %v157
    %159 = vdwg.mxu0
    %v160 = vadd.f32 %v127, %v158
    %v161 = vxor.u32 %v160, 2147483648
    %v162 = vmul.f32 %v161, 1.442695
    %v163 = vpow.pop %v162
    %v164 = vadd.f32 %v163, 1.0
    %v165 = vrcp.pop %v164
    %v166 = vmul.f32 %v164, %v165
    %v167 = vsub.f32 1.0, %v166
    %v168 = vmul.f32 %v165, %v167
    %v169 = vadd.f32 %v165, %v168
    %vm170 = vweird.f32 %v164
    %vm171 = vweird.f32 %v165
    %vm172 = vmor %vm170, %vm171
    %v173 = vsel %vm172, %v165, %v169
    %v174 = vand.u32 2147483647, %v164
    %vm175 = vcmp.eq.f32.partialorder %v174, 8.507059e+37
    %v176 = vand.u32 %v164, 2147483648
    %v177 = vor.u32 1.1754944e-38, %v176
    %v178 = vsel %vm175, %v177, %v173
    %v179 = vmul.f32 1.0, %v178
    %v180 = vtanh.pop %v160
    %v181 = vmul.f32 %v179, 0.0
    %183 = vrot.lane.b32.xlu0 %v180, 64
    %v184 = vpop.permute.xlu0 %183
    %v186 = vmul.f32 %v179, %v184
    %188 = vrot.lane.b32.xlu0 %v186, 32
    %v189 = vpop.permute.xlu0 %188
    %v191 = vadd.f32 %v181, %v189
    %v192 = vtanh.pop %v191
    %194 = vrot.lane.b32.xlu0 %v192, 64
    %v195 = vpop.permute.xlu0 %194
    %v197 = vmul.f32 %v179, %v195
    %199 = vrot.lane.b32.xlu0 %v197, 32
    %v200 = vpop.permute.xlu0 %199
    %v201 = vsel %vm136, %v200, 0
    %203 = vmatpush.msra.mxu0 0.0
    %204 = vmatpush.msra.mxu0 0.0
    %205 = vmatpush.msra.mxu0 0.0
    %206 = vmatpush.msra.mxu0 0.0
    %207 = vmatpush.msra.mxu0 0.0
    %208 = vmatpush.msra.mxu0 0.0
    %209 = vmatpush.msra.mxu0 0.0
    %210 = vmatpush.msra.mxu0 0.0
    %211 = vmatpush.msra.mxu0 0.0
    %212 = vmatpush.msra.mxu0 0.0
    %213 = vmatpush.msra.mxu0 0.0
    %214 = vmatpush.msra.mxu0 0.0
    %215 = vmatpush.msra.mxu0 %v135
    %216 = vmatpush.msra.mxu0 %v134
    %217 = vmatpush.msra.mxu0 %v133
    %218 = vmatpush.msra.mxu0 %v132
    %219 = vmatmul.f32.gmra.mxu0 %v201
    %v220 = vpop.f32.mrf.mxu0
    %v221 = vadd.f32 0.0, %v220
    %222 = vdwg.mxu0
    %v224 = vrot.slane %v221, 6
    %v226 = vadd.f32 %v127, %v224
    %v227 = vxor.u32 %v226, 2147483648
    %v228 = vmul.f32 %v227, 1.442695
    %v229 = vpow.pop %v228
    %v230 = vadd.f32 %v229, 1.0
    %v231 = vrcp.pop %v230
    %v232 = vmul.f32 %v230, %v231
    %v233 = vsub.f32 1.0, %v232
    %v234 = vmul.f32 %v231, %v233
    %v235 = vadd.f32 %v231, %v234
    %vm236 = vweird.f32 %v230
    %vm237 = vweird.f32 %v231
    %vm238 = vmor %vm236, %vm237
    %v239 = vsel %vm238, %v231, %v235
    %v240 = vand.u32 2147483647, %v230
    %vm241 = vcmp.eq.f32.partialorder %v240, 8.507059e+37
    %v242 = vand.u32 %v230, 2147483648
    %v243 = vor.u32 1.1754944e-38, %v242
    %v244 = vsel %vm241, %v243, %v239
    %v245 = vmul.f32 1.0, %v244
    %v246 = vtanh.pop %v226
    %v248 = vrot.slane %v191, 6
    %v250 = vmul.f32 %v245, %v248
    %252 = vrot.lane.b32.xlu0 %v246, 64
    %v253 = vpop.permute.xlu0 %252
    %v255 = vmul.f32 %v245, %v253
    %257 = vrot.lane.b32.xlu0 %v255, 32
    %v258 = vpop.permute.xlu0 %257
    %v260 = vadd.f32 %v250, %v258
    %v261 = vtanh.pop %v260
    %263 = vrot.lane.b32.xlu0 %v261, 64
    %v264 = vpop.permute.xlu0 %263
    %v266 = vmul.f32 %v245, %v264
    %v268 = vrot.slane %v266, 2
    %269 = vrot.lane.b32.xlu0 %v268, 32
    %v270 = vpop.permute.xlu0 %269
    %v271 = vsel %vm136, %v270, 0
    %273 = vmatpush.msra.mxu0 0.0
    %274 = vmatpush.msra.mxu0 0.0
    %275 = vmatpush.msra.mxu0 0.0
    %276 = vmatpush.msra.mxu0 0.0
    %277 = vmatpush.msra.mxu0 0.0
    %278 = vmatpush.msra.mxu0 0.0
    %279 = vmatpush.msra.mxu0 0.0
    %280 = vmatpush.msra.mxu0 0.0
    %281 = vmatpush.msra.mxu0 0.0
    %282 = vmatpush.msra.mxu0 0.0
    %283 = vmatpush.msra.mxu0 0.0
    %284 = vmatpush.msra.mxu0 0.0
    %285 = vmatpush.msra.mxu0 %v135
    %286 = vmatpush.msra.mxu0 %v134
    %287 = vmatpush.msra.mxu0 %v133
    %288 = vmatpush.msra.mxu0 %v132
    %289 = vmatmul.f32.gmra.mxu0 %v271
    %v290 = vpop.f32.mrf.mxu0
    %v291 = vadd.f32 0.0, %v290
    %292 = vdwg.mxu0
    %v294 = vrot.slane %v291, 4
    %v296 = vadd.f32 %v127, %v294
    %v297 = vxor.u32 %v296, 2147483648
    %v298 = vmul.f32 %v297, 1.442695
    %v299 = vpow.pop %v298
    %v300 = vadd.f32 %v299, 1.0
    %v301 = vrcp.pop %v300
    %v302 = vmul.f32 %v300, %v301
    %v303 = vsub.f32 1.0, %v302
    %v304 = vmul.f32 %v301, %v303
    %v305 = vadd.f32 %v301, %v304
    %vm306 = vweird.f32 %v300
    %vm307 = vweird.f32 %v301
    %vm308 = vmor %vm306, %vm307
    %v309 = vsel %vm308, %v301, %v305
    %v310 = vand.u32 2147483647, %v300
    %vm311 = vcmp.eq.f32.partialorder %v310, 8.507059e+37
    %v312 = vand.u32 %v300, 2147483648
    %v313 = vor.u32 1.1754944e-38, %v312
    %v314 = vsel %vm311, %v313, %v309
    %v315 = vmul.f32 1.0, %v314
    %v316 = vtanh.pop %v296
    %v318 = vrot.slane %v260, 6
    %v320 = vmul.f32 %v315, %v318
    %322 = vrot.lane.b32.xlu0 %v316, 64
    %v323 = vpop.permute.xlu0 %322
    %v325 = vmul.f32 %v315, %v323
    %327 = vrot.lane.b32.xlu0 %v325, 32
    %v328 = vpop.permute.xlu0 %327
    %v330 = vadd.f32 %v320, %v328
    %v331 = vtanh.pop %v330
    %333 = vrot.lane.b32.xlu0 %v331, 64
    %v334 = vpop.permute.xlu0 %333
    %v336 = vmul.f32 %v315, %v334
    %v338 = vrot.slane %v336, 4
    %339 = vrot.lane.b32.xlu0 %v338, 32
    %v340 = vpop.permute.xlu0 %339
    %v341 = vsel %vm136, %v340, 0
    %343 = vmatpush.msra.mxu0 0.0
    %344 = vmatpush.msra.mxu0 0.0
    %345 = vmatpush.msra.mxu0 0.0
    %346 = vmatpush.msra.mxu0 0.0
    %347 = vmatpush.msra.mxu0 0.0
    %348 = vmatpush.msra.mxu0 0.0
    %349 = vmatpush.msra.mxu0 0.0
    %350 = vmatpush.msra.mxu0 0.0
    %351 = vmatpush.msra.mxu0 0.0
    %352 = vmatpush.msra.mxu0 0.0
    %353 = vmatpush.msra.mxu0 0.0
    %354 = vmatpush.msra.mxu0 0.0
    %355 = vmatpush.msra.mxu0 %v135
    %356 = vmatpush.msra.mxu0 %v134
    %357 = vmatpush.msra.mxu0 %v133
    %358 = vmatpush.msra.mxu0 %v132
    %359 = vmatmul.f32.gmra.mxu0 %v341
    %v360 = vpop.f32.mrf.mxu0
    %v361 = vadd.f32 0.0, %v360
    %362 = vdwg.mxu0
    %v364 = vrot.slane %v361, 2
    %v366 = vadd.f32 %v127, %v364
    %v367 = vxor.u32 %v366, 2147483648
    %v368 = vmul.f32 %v367, 1.442695
    %v369 = vpow.pop %v368
    %v370 = vadd.f32 %v369, 1.0
    %v371 = vrcp.pop %v370
    %v372 = vmul.f32 %v370, %v371
    %v373 = vsub.f32 1.0, %v372
    %v374 = vmul.f32 %v371, %v373
    %v375 = vadd.f32 %v371, %v374
    %vm376 = vweird.f32 %v370
    %vm377 = vweird.f32 %v371
    %vm378 = vmor %vm376, %vm377
    %v379 = vsel %vm378, %v371, %v375
    %v380 = vand.u32 2147483647, %v370
    %vm381 = vcmp.eq.f32.partialorder %v380, 8.507059e+37
    %v382 = vand.u32 %v370, 2147483648
    %v383 = vor.u32 1.1754944e-38, %v382
    %v384 = vsel %vm381, %v383, %v379
    %v385 = vmul.f32 1.0, %v384
    %v386 = vtanh.pop %v366
    %v388 = vrot.slane %v330, 6
    %v390 = vmul.f32 %v385, %v388
    %392 = vrot.lane.b32.xlu0 %v386, 64
    %v393 = vpop.permute.xlu0 %392
    %v395 = vmul.f32 %v385, %v393
    %397 = vrot.lane.b32.xlu0 %v395, 32
    %v398 = vpop.permute.xlu0 %397
    %v400 = vadd.f32 %v390, %v398
    %v401 = vtanh.pop %v400
    %403 = vrot.lane.b32.xlu0 %v401, 64
    %v404 = vpop.permute.xlu0 %403
    %v406 = vmul.f32 %v385, %v404
    %v408 = vrot.slane %v406, 6
    %409 = vrot.lane.b32.xlu0 %v408, 32
    %v410 = vpop.permute.xlu0 %409
    %v411 = vsel %vm136, %v410, 0
    %413 = vmatpush.msra.mxu0 0.0
    %414 = vmatpush.msra.mxu0 0.0
    %415 = vmatpush.msra.mxu0 0.0
    %416 = vmatpush.msra.mxu0 0.0
    %417 = vmatpush.msra.mxu0 0.0
    %418 = vmatpush.msra.mxu0 0.0
    %419 = vmatpush.msra.mxu0 0.0
    %420 = vmatpush.msra.mxu0 0.0
    %421 = vmatpush.msra.mxu0 0.0
    %422 = vmatpush.msra.mxu0 0.0
    %423 = vmatpush.msra.mxu0 0.0
    %424 = vmatpush.msra.mxu0 0.0
    %425 = vmatpush.msra.mxu0 %v135
    %426 = vmatpush.msra.mxu0 %v134
    %427 = vmatpush.msra.mxu0 %v133
    %428 = vmatpush.msra.mxu0 %v132
    %429 = vmatmul.f32.gmra.mxu0 %v411
    %v430 = vpop.f32.mrf.mxu0
    %v431 = vadd.f32 0.0, %v430
    %432 = vdwg.mxu0
    %v433 = vadd.f32 %v130, %v431
    %v434 = vxor.u32 %v433, 2147483648
    %v435 = vmul.f32 %v434, 1.442695
    %v436 = vpow.pop %v435
    %v437 = vadd.f32 %v436, 1.0
    %v438 = vrcp.pop %v437
    %v439 = vmul.f32 %v437, %v438
    %v440 = vsub.f32 1.0, %v439
    %v441 = vmul.f32 %v438, %v440
    %v442 = vadd.f32 %v438, %v441
    %vm443 = vweird.f32 %v437
    %vm444 = vweird.f32 %v438
    %vm445 = vmor %vm443, %vm444
    %v446 = vsel %vm445, %v438, %v442
    %v447 = vand.u32 2147483647, %v437
    %vm448 = vcmp.eq.f32.partialorder %v447, 8.507059e+37
    %v449 = vand.u32 %v437, 2147483648
    %v450 = vor.u32 1.1754944e-38, %v449
    %v451 = vsel %vm448, %v450, %v446
    %v452 = vmul.f32 1.0, %v451
    %v453 = vtanh.pop %v433
    %v455 = vrot.slane %v400, 6
    %v457 = vmul.f32 %v452, %v455
    %459 = vrot.lane.b32.xlu0 %v453, 64
    %v460 = vpop.permute.xlu0 %459
    %v462 = vmul.f32 %v452, %v460
    %464 = vrot.lane.b32.xlu0 %v462, 32
    %v465 = vpop.permute.xlu0 %464
    %v467 = vadd.f32 %v457, %v465
    %v468 = vtanh.pop %v467
    %470 = vrot.lane.b32.xlu0 %v468, 64
    %v471 = vpop.permute.xlu0 %470
    %v473 = vmul.f32 %v452, %v471
    %475 = vrot.lane.b32.xlu0 %v473, 32
    %v476 = vpop.permute.xlu0 %475
    %v477 = vsel %vm136, %v476, 0
    %479 = vmatpush.msra.mxu0 0.0
    %480 = vmatpush.msra.mxu0 0.0
    %481 = vmatpush.msra.mxu0 0.0
    %482 = vmatpush.msra.mxu0 0.0
    %483 = vmatpush.msra.mxu0 0.0
    %484 = vmatpush.msra.mxu0 0.0
    %485 = vmatpush.msra.mxu0 0.0
    %486 = vmatpush.msra.mxu0 0.0
    %487 = vmatpush.msra.mxu0 0.0
    %488 = vmatpush.msra.mxu0 0.0
    %489 = vmatpush.msra.mxu0 0.0
    %490 = vmatpush.msra.mxu0 0.0
    %491 = vmatpush.msra.mxu0 %v135
    %492 = vmatpush.msra.mxu0 %v134
    %493 = vmatpush.msra.mxu0 %v133
    %494 = vmatpush.msra.mxu0 %v132
    %495 = vmatmul.f32.gmra.mxu0 %v477
    %v496 = vpop.f32.mrf.mxu0
    %v497 = vadd.f32 0.0, %v496
    %498 = vdwg.mxu0
    %v500 = vrot.slane %v497, 6
    %v502 = vadd.f32 %v130, %v500
    %v503 = vxor.u32 %v502, 2147483648
    %v504 = vmul.f32 %v503, 1.442695
    %v505 = vpow.pop %v504
    %v506 = vadd.f32 %v505, 1.0
    %v507 = vrcp.pop %v506
    %v508 = vmul.f32 %v506, %v507
    %v509 = vsub.f32 1.0, %v508
    %v510 = vmul.f32 %v507, %v509
    %v511 = vadd.f32 %v507, %v510
    %vm512 = vweird.f32 %v506
    %vm513 = vweird.f32 %v507
    %vm514 = vmor %vm512, %vm513
    %v515 = vsel %vm514, %v507, %v511
    %v516 = vand.u32 2147483647, %v506
    %vm517 = vcmp.eq.f32.partialorder %v516, 8.507059e+37
    %v518 = vand.u32 %v506, 2147483648
    %v519 = vor.u32 1.1754944e-38, %v518
    %v520 = vsel %vm517, %v519, %v515
    %v521 = vmul.f32 1.0, %v520
    %v522 = vtanh.pop %v502
    %v524 = vrot.slane %v467, 6
    %v526 = vmul.f32 %v521, %v524
    %528 = vrot.lane.b32.xlu0 %v522, 64
    %v529 = vpop.permute.xlu0 %528
    %v531 = vmul.f32 %v521, %v529
    %533 = vrot.lane.b32.xlu0 %v531, 32
    %v534 = vpop.permute.xlu0 %533
    %v536 = vadd.f32 %v526, %v534
    %v537 = vtanh.pop %v536
    %539 = vrot.lane.b32.xlu0 %v537, 64
    %v540 = vpop.permute.xlu0 %539
    %v542 = vmul.f32 %v521, %v540
    %v544 = vrot.slane %v542, 2
    %545 = vrot.lane.b32.xlu0 %v544, 32
    %v546 = vpop.permute.xlu0 %545
    %v547 = vsel %vm136, %v546, 0
    %549 = vmatpush.msra.mxu0 0.0
    %550 = vmatpush.msra.mxu0 0.0
    %551 = vmatpush.msra.mxu0 0.0
    %552 = vmatpush.msra.mxu0 0.0
    %553 = vmatpush.msra.mxu0 0.0
    %554 = vmatpush.msra.mxu0 0.0
    %555 = vmatpush.msra.mxu0 0.0
    %556 = vmatpush.msra.mxu0 0.0
    %557 = vmatpush.msra.mxu0 0.0
    %558 = vmatpush.msra.mxu0 0.0
    %559 = vmatpush.msra.mxu0 0.0
    %560 = vmatpush.msra.mxu0 0.0
    %561 = vmatpush.msra.mxu0 %v135
    %562 = vmatpush.msra.mxu0 %v134
    %563 = vmatpush.msra.mxu0 %v133
    %564 = vmatpush.msra.mxu0 %v132
    %565 = vmatmul.f32.gmra.mxu0 %v547
    %v566 = vpop.f32.mrf.mxu0
    %v567 = vadd.f32 0.0, %v566
    %568 = vdwg.mxu0
    %v570 = vrot.slane %v567, 4
    %v572 = vadd.f32 %v130, %v570
    %v573 = vxor.u32 %v572, 2147483648
    %v574 = vmul.f32 %v573, 1.442695
    %v575 = vpow.pop %v574
    %v576 = vadd.f32 %v575, 1.0
    %v577 = vrcp.pop %v576
    %v578 = vmul.f32 %v576, %v577
    %v579 = vsub.f32 1.0, %v578
    %v580 = vmul.f32 %v577, %v579
    %v581 = vadd.f32 %v577, %v580
    %vm582 = vweird.f32 %v576
    %vm583 = vweird.f32 %v577
    %vm584 = vmor %vm582, %vm583
    %v585 = vsel %vm584, %v577, %v581
    %v586 = vand.u32 2147483647, %v576
    %vm587 = vcmp.eq.f32.partialorder %v586, 8.507059e+37
    %v588 = vand.u32 %v576, 2147483648
    %v589 = vor.u32 1.1754944e-38, %v588
    %v590 = vsel %vm587, %v589, %v585
    %v591 = vmul.f32 1.0, %v590
    %v592 = vtanh.pop %v572
    %v594 = vrot.slane %v536, 6
    %v596 = vmul.f32 %v591, %v594
    %598 = vrot.lane.b32.xlu0 %v592, 64
    %v599 = vpop.permute.xlu0 %598
    %v601 = vmul.f32 %v591, %v599
    %603 = vrot.lane.b32.xlu0 %v601, 32
    %v604 = vpop.permute.xlu0 %603
    %v606 = vadd.f32 %v596, %v604
    %v607 = vtanh.pop %v606
    %609 = vrot.lane.b32.xlu0 %v607, 64
    %v610 = vpop.permute.xlu0 %609
    %v612 = vmul.f32 %v591, %v610
    %v614 = vrot.slane %v612, 4
    %615 = vrot.lane.b32.xlu0 %v614, 32
    %v616 = vpop.permute.xlu0 %615
    %v617 = vsel %vm136, %v616, 0
    %619 = vmatpush.msra.mxu0 0.0
    %620 = vmatpush.msra.mxu0 0.0
    %621 = vmatpush.msra.mxu0 0.0
    %622 = vmatpush.msra.mxu0 0.0
    %623 = vmatpush.msra.mxu0 0.0
    %624 = vmatpush.msra.mxu0 0.0
    %625 = vmatpush.msra.mxu0 0.0
    %626 = vmatpush.msra.mxu0 0.0
    %627 = vmatpush.msra.mxu0 0.0
    %628 = vmatpush.msra.mxu0 0.0
    %629 = vmatpush.msra.mxu0 0.0
    %630 = vmatpush.msra.mxu0 0.0
    %631 = vmatpush.msra.mxu0 %v135
    %632 = vmatpush.msra.mxu0 %v134
    %633 = vmatpush.msra.mxu0 %v133
    %634 = vmatpush.msra.mxu0 %v132
    %635 = vmatmul.f32.gmra.mxu0 %v617
    %v636 = vpop.f32.mrf.mxu0
    %v637 = vadd.f32 0.0, %v636
    %638 = vdwg.mxu0
    %v640 = vrot.slane %v637, 2
    %v642 = vadd.f32 %v130, %v640
    %v643 = vxor.u32 %v642, 2147483648
    %v644 = vmul.f32 %v643, 1.442695
    %v645 = vpow.pop %v644
    %v646 = vadd.f32 %v645, 1.0
    %v647 = vrcp.pop %v646
    %v648 = vmul.f32 %v646, %v647
    %v649 = vsub.f32 1.0, %v648
    %v650 = vmul.f32 %v647, %v649
    %v651 = vadd.f32 %v647, %v650
    %vm652 = vweird.f32 %v646
    %vm653 = vweird.f32 %v647
    %vm654 = vmor %vm652, %vm653
    %v655 = vsel %vm654, %v647, %v651
    %v656 = vand.u32 2147483647, %v646
    %vm657 = vcmp.eq.f32.partialorder %v656, 8.507059e+37
    %v658 = vand.u32 %v646, 2147483648
    %v659 = vor.u32 1.1754944e-38, %v658
    %v660 = vsel %vm657, %v659, %v655
    %v661 = vmul.f32 1.0, %v660
    %v662 = vtanh.pop %v642
    %v664 = vrot.slane %v606, 6
    %v666 = vmul.f32 %v661, %v664
    %668 = vrot.lane.b32.xlu0 %v662, 64
    %v669 = vpop.permute.xlu0 %668
    %v671 = vmul.f32 %v661, %v669
    %673 = vrot.lane.b32.xlu0 %v671, 32
    %v674 = vpop.permute.xlu0 %673
    %v676 = vadd.f32 %v666, %v674
    %v677 = vtanh.pop %v676
    %679 = vrot.lane.b32.xlu0 %v677, 64
    %v680 = vpop.permute.xlu0 %679
    %v682 = vmul.f32 %v661, %v680
    %v683 = vld [vmem:[#allocation8] sm:$0xff]
    %v684 = vld [vmem:[#allocation8 + $0x8] sm:$0xff]
    %v685 = vld [vmem:[#allocation8 + $0x10] sm:$0xff]
    %v686 = vld [vmem:[#allocation8 + $0x18] sm:$0xff]
    %v687 = vld [vmem:[%s5] sm:$0x1]
    %v689 = vperm.slane %v687, 0
    %v692 = vrot.slane %v682, 6
    %693 = vrot.lane.b32.xlu0 %v692, 32
    %v694 = vpop.permute.xlu0 %693
    %v695 = vsel %vm136, %v694, 0
    %697 = vmatpush.msra.mxu0 0.0
    %698 = vmatpush.msra.mxu0 0.0
    %699 = vmatpush.msra.mxu0 0.0
    %700 = vmatpush.msra.mxu0 0.0
    %701 = vmatpush.msra.mxu0 0.0
    %702 = vmatpush.msra.mxu0 0.0
    %703 = vmatpush.msra.mxu0 0.0
    %704 = vmatpush.msra.mxu0 0.0
    %705 = vmatpush.msra.mxu0 0.0
    %706 = vmatpush.msra.mxu0 0.0
    %707 = vmatpush.msra.mxu0 0.0
    %708 = vmatpush.msra.mxu0 0.0
    %709 = vmatpush.msra.mxu0 %v686
    %710 = vmatpush.msra.mxu0 %v685
    %711 = vmatpush.msra.mxu0 %v684
    %712 = vmatpush.msra.mxu0 %v683
    %713 = vmatmul.f32.gmra.mxu0 %v695
    %v714 = vpop.f32.mrf.mxu0
    %v715 = vadd.f32 %v689, %v714
    %716 = vdwg.mxu0
    %717 = vst [vmem:[#allocation10] sm:$0x3] %v715
    // Predicated region
    $region42: #{tpu_custom_call.1} parent=1 // pred_check
      _
    $region43: #{tpu_custom_call.1} parent=1 // pred_check_branch
      %719 = sbr.rel (0) target = $region45
    $region44: #{tpu_custom_call.1} parent=1 // pred_region
      %721 = vsyncadd [#allocation4], 0
      %s723 = sshll.u32 [#allocation10], 4
      %s724 = int_to_ptr.vmem [resolvable:$true] %s723
      %s725 = sshll.u32 %s6, 4
      %s726 = int_to_ptr.hbm [resolvable:$true] %s725
      %728 = dma.vmem_to_hbm [thread:$0]  %s724, 32, %s726, [#allocation4]
    $region45: #{tpu_custom_call.1} parent=1 // pred_fallthru
      _
    // Predicated region
    $region46: #{tpu_custom_call.1} parent=1 // pred_check
      _
    $region47: #{tpu_custom_call.1} parent=1 // pred_check_branch
      %730 = sbr.rel (0) target = $region49
    $region48: #{tpu_custom_call.1} parent=1 // pred_region
      %732 = dma.done [#allocation4], 32
    $region49: #{tpu_custom_call.1} parent=1 // pred_fallthru
      _
    %733 = vsyncpa [#allocation3], 1
    %734 = vsyncpa [#allocation6], 1
    %735 = vsyncpa [#allocation9], 1
    %736 = vsyncpa [#allocation4], 1

</llo_original>
